<compile_context>
chip_gen: v7x
topology: tpu7x:2x2x1
jax: 0.10.0
libtpu: 0.0.40
codegen_flags: <defaults>
</compile_context>

<pallas_src>
import jax
import jax.numpy as jnp
from jax import lax
from jax.experimental import pallas as pl
from jax.experimental.pallas import tpu as pltpu


def _round_up(x, m):
    return ((x + m - 1) // m) * m


def sentiment_rnn_kernel(xw_ref, whh_ref, h_ref):
    # xw_ref:  [S, TB, Hp]  precomputed x_t @ Wxh + bh (time-major, padded)
    # whh_ref: [Hp, Hp]     recurrent weight (zero-padded)
    # h_ref:   [TB, Hp]     output: final hidden state for this batch tile
    S = xw_ref.shape[0]
    h0 = jnp.zeros(h_ref.shape, jnp.float32)

    def step(t, h):
        pre = xw_ref[t] + jnp.dot(h, whh_ref[...],
                                  preferred_element_type=jnp.float32)
        return jnp.tanh(pre)

    # S is static and small: full unroll gives the scheduler cross-iteration
    # visibility (tanh of step t overlaps the MXU issue of step t+1).
    h_ref[...] = lax.fori_loop(0, S, step, h0, unroll=True)


def sentiment_forward(xi, params):
    """xi: int32 token ids [batch, seq] -> float32 [batch] (output=1 squeezed)."""
    emb, wxh, whh, bh, who, bo = params
    B, S = xi.shape
    H = wxh.shape[1]

    # --- XLA glue: pre-project the embedding table once and gather projected
    # rows time-major.  This removes the per-step x@Wxh and the bias broadcast
    # from the serial recurrence and kills the [B,S,E] intermediate + transpose.
    emb_proj = (emb @ wxh + bh).astype(jnp.float32)          # [vocab, H]
    xw = jnp.take(emb_proj, xi.T, axis=0)                    # [S, B, H]

    # --- Pad to TPU-friendly shapes: batch -> mult of 8, hidden -> mult of 128.
    TB = 8
    Bp = _round_up(B, TB)
    Hp = _round_up(H, 128)
    xw_p = jnp.pad(xw, ((0, 0), (0, Bp - B), (0, Hp - H)))
    whh_p = jnp.pad(whh, ((0, Hp - H), (0, Hp - H)))

    h = pl.pallas_call(
        sentiment_rnn_kernel,
        out_shape=jax.ShapeDtypeStruct((Bp, Hp), jnp.float32),
        grid=(Bp // TB,),
        in_specs=[
            pl.BlockSpec((S, TB, Hp), lambda i: (0, i, 0)),
            pl.BlockSpec((Hp, Hp), lambda i: (0, 0)),
        ],
        out_specs=pl.BlockSpec((TB, Hp), lambda i: (i, 0)),
        compiler_params=pltpu.CompilerParams(
            dimension_semantics=("parallel",)),
    )(xw_p, whh_p)

    h = h[:B, :H]                                            # drop padding
    # Lane-width-1 head stays in the wrapper (keeps the kernel output lane-dense).
    y = h @ who + bo                                         # [B, 1]
    # Note: for B == 1 this collapses to a 0-d scalar, mirroring torch .squeeze().
    return jnp.squeeze(y)


def init_params(key, vocab, embed, context, output=1):
    k0, k1, k2, k3 = jax.random.split(key, 4)
    emb = jax.random.normal(k0, (vocab, embed), jnp.float32) * 0.1
    wxh = jax.random.normal(k1, (embed, context), jnp.float32) * (1.0 / embed ** 0.5)
    whh = jax.random.normal(k2, (context, context), jnp.float32) * (1.0 / context ** 0.5)
    bh = jnp.zeros((1, context), jnp.float32)
    who = jax.random.normal(k3, (context, output), jnp.float32) * (1.0 / context ** 0.5)
    bo = jnp.zeros((1, output), jnp.float32)
    return emb, wxh, whh, bh, who, bo


def reference_forward(xi, params):
    emb, wxh, whh, bh, who, bo = params
    x = jnp.take(emb, xi, axis=0)            # [B, S, E]
    B, S, _ = x.shape
    h = jnp.zeros((B, wxh.shape[1]), jnp.float32)
    for t in range(S):
        h = jnp.tanh(x[:, t, :] @ wxh + h @ whh + bh)
    return jnp.squeeze(h @ who + bo)


if __name__ == "__main__":
    vocab, embed, context, output = 32, 16, 32, 1
    batch, seq = 4, 8

    key = jax.random.PRNGKey(0)
    pkey, xkey = jax.random.split(key)
    params = init_params(pkey, vocab, embed, context, output)
    xi = jax.random.randint(xkey, (batch, seq), 0, vocab, dtype=jnp.int32)

    y = sentiment_forward(xi, params)
    y = jax.block_until_ready(y)

    y_ref = reference_forward(xi, params)
    assert y.shape == (batch,)
    assert jnp.allclose(y, y_ref, atol=1e-5, rtol=1e-5)

    # TODO(synk): torch forward body references an undefined `y` and __init__
    # defines no layers; this implements the implied embed->RNN->linear head.
    print("KERNEL_OK")
</pallas_src>

<mosaic_0001>
module attributes {stable_mosaic.version = 11 : i64} {
  func.func @sentiment_rnn_kernel(%arg0: i32, %arg1: memref<8x8x128xf32, #tpu.memory_space<vmem>>, %arg2: memref<128x128xf32, #tpu.memory_space<vmem>>, %arg3: memref<8x128xf32, #tpu.memory_space<vmem>>) attributes {dimension_semantics = [#tpu.dimension_semantics<parallel>], iteration_bounds = array<i64: 1>, scalar_prefetch = 0 : i64, scratch_operands = 0 : i64, tpu.core_type = #tpu.core_type<tc>, window_params = [{transform_indices = @transform_0, window_bounds = array<i64: 8, 8, 128>}, {pipeline_mode = #tpu.pipeline_mode<synchronous>, transform_indices = @transform_1, window_bounds = array<i64: 128, 128>}, {transform_indices = @transform_2, window_bounds = array<i64: 8, 128>}]} {
    %cst = arith.constant 0.000000e+00 : f32
    %0 = vector.broadcast %cst : f32 to vector<8x128xf32>
    %c0_i32 = arith.constant 0 : i32
    %1 = arith.index_cast %c0_i32 : i32 to index
    %c0 = arith.constant 0 : index
    %c0_0 = arith.constant 0 : index
    %2 = vector.load %arg1[%1, %c0, %c0_0] : memref<8x8x128xf32, #tpu.memory_space<vmem>>, vector<1x8x128xf32>
    %3 = vector.shape_cast %2 : vector<1x8x128xf32> to vector<8x128xf32>
    %c0_1 = arith.constant 0 : index
    %c0_2 = arith.constant 0 : index
    %4 = vector.load %arg2[%c0_1, %c0_2] : memref<128x128xf32, #tpu.memory_space<vmem>>, vector<128x128xf32>
    %cst_3 = arith.constant dense<0.000000e+00> : vector<8x128xf32>
    %5 = tpu.matmul %0, %4, %cst_3 {dimension_numbers = #tpu.dot_dimension_numbers<[1], [0], [0], [1], [0, 0, 1, 1], [], []>} : vector<8x128xf32>, vector<128x128xf32>, vector<8x128xf32> -> vector<8x128xf32>
    %6 = arith.addf %3, %5 : vector<8x128xf32>
    %7 = math.tanh %6 : vector<8x128xf32>
    %c1_i32 = arith.constant 1 : i32
    %8 = arith.index_cast %c1_i32 : i32 to index
    %c0_4 = arith.constant 0 : index
    %c0_5 = arith.constant 0 : index
    %9 = vector.load %arg1[%8, %c0_4, %c0_5] : memref<8x8x128xf32, #tpu.memory_space<vmem>>, vector<1x8x128xf32>
    %10 = vector.shape_cast %9 : vector<1x8x128xf32> to vector<8x128xf32>
    %c0_6 = arith.constant 0 : index
    %c0_7 = arith.constant 0 : index
    %11 = vector.load %arg2[%c0_6, %c0_7] : memref<128x128xf32, #tpu.memory_space<vmem>>, vector<128x128xf32>
    %cst_8 = arith.constant dense<0.000000e+00> : vector<8x128xf32>
    %12 = tpu.matmul %7, %11, %cst_8 {dimension_numbers = #tpu.dot_dimension_numbers<[1], [0], [0], [1], [0, 0, 1, 1], [], []>} : vector<8x128xf32>, vector<128x128xf32>, vector<8x128xf32> -> vector<8x128xf32>
    %13 = arith.addf %10, %12 : vector<8x128xf32>
    %14 = math.tanh %13 : vector<8x128xf32>
    %c2_i32 = arith.constant 2 : i32
    %15 = arith.index_cast %c2_i32 : i32 to index
    %c0_9 = arith.constant 0 : index
    %c0_10 = arith.constant 0 : index
    %16 = vector.load %arg1[%15, %c0_9, %c0_10] : memref<8x8x128xf32, #tpu.memory_space<vmem>>, vector<1x8x128xf32>
    %17 = vector.shape_cast %16 : vector<1x8x128xf32> to vector<8x128xf32>
    %c0_11 = arith.constant 0 : index
    %c0_12 = arith.constant 0 : index
    %18 = vector.load %arg2[%c0_11, %c0_12] : memref<128x128xf32, #tpu.memory_space<vmem>>, vector<128x128xf32>
    %cst_13 = arith.constant dense<0.000000e+00> : vector<8x128xf32>
    %19 = tpu.matmul %14, %18, %cst_13 {dimension_numbers = #tpu.dot_dimension_numbers<[1], [0], [0], [1], [0, 0, 1, 1], [], []>} : vector<8x128xf32>, vector<128x128xf32>, vector<8x128xf32> -> vector<8x128xf32>
    %20 = arith.addf %17, %19 : vector<8x128xf32>
    %21 = math.tanh %20 : vector<8x128xf32>
    %c3_i32 = arith.constant 3 : i32
    %22 = arith.index_cast %c3_i32 : i32 to index
    %c0_14 = arith.constant 0 : index
    %c0_15 = arith.constant 0 : index
    %23 = vector.load %arg1[%22, %c0_14, %c0_15] : memref<8x8x128xf32, #tpu.memory_space<vmem>>, vector<1x8x128xf32>
    %24 = vector.shape_cast %23 : vector<1x8x128xf32> to vector<8x128xf32>
    %c0_16 = arith.constant 0 : index
    %c0_17 = arith.constant 0 : index
    %25 = vector.load %arg2[%c0_16, %c0_17] : memref<128x128xf32, #tpu.memory_space<vmem>>, vector<128x128xf32>
    %cst_18 = arith.constant dense<0.000000e+00> : vector<8x128xf32>
    %26 = tpu.matmul %21, %25, %cst_18 {dimension_numbers = #tpu.dot_dimension_numbers<[1], [0], [0], [1], [0, 0, 1, 1], [], []>} : vector<8x128xf32>, vector<128x128xf32>, vector<8x128xf32> -> vector<8x128xf32>
    %27 = arith.addf %24, %26 : vector<8x128xf32>
    %28 = math.tanh %27 : vector<8x128xf32>
    %c4_i32 = arith.constant 4 : i32
    %29 = arith.index_cast %c4_i32 : i32 to index
    %c0_19 = arith.constant 0 : index
    %c0_20 = arith.constant 0 : index
    %30 = vector.load %arg1[%29, %c0_19, %c0_20] : memref<8x8x128xf32, #tpu.memory_space<vmem>>, vector<1x8x128xf32>
    %31 = vector.shape_cast %30 : vector<1x8x128xf32> to vector<8x128xf32>
    %c0_21 = arith.constant 0 : index
    %c0_22 = arith.constant 0 : index
    %32 = vector.load %arg2[%c0_21, %c0_22] : memref<128x128xf32, #tpu.memory_space<vmem>>, vector<128x128xf32>
    %cst_23 = arith.constant dense<0.000000e+00> : vector<8x128xf32>
    %33 = tpu.matmul %28, %32, %cst_23 {dimension_numbers = #tpu.dot_dimension_numbers<[1], [0], [0], [1], [0, 0, 1, 1], [], []>} : vector<8x128xf32>, vector<128x128xf32>, vector<8x128xf32> -> vector<8x128xf32>
    %34 = arith.addf %31, %33 : vector<8x128xf32>
    %35 = math.tanh %34 : vector<8x128xf32>
    %c5_i32 = arith.constant 5 : i32
    %36 = arith.index_cast %c5_i32 : i32 to index
    %c0_24 = arith.constant 0 : index
    %c0_25 = arith.constant 0 : index
    %37 = vector.load %arg1[%36, %c0_24, %c0_25] : memref<8x8x128xf32, #tpu.memory_space<vmem>>, vector<1x8x128xf32>
    %38 = vector.shape_cast %37 : vector<1x8x128xf32> to vector<8x128xf32>
    %c0_26 = arith.constant 0 : index
    %c0_27 = arith.constant 0 : index
    %39 = vector.load %arg2[%c0_26, %c0_27] : memref<128x128xf32, #tpu.memory_space<vmem>>, vector<128x128xf32>
    %cst_28 = arith.constant dense<0.000000e+00> : vector<8x128xf32>
    %40 = tpu.matmul %35, %39, %cst_28 {dimension_numbers = #tpu.dot_dimension_numbers<[1], [0], [0], [1], [0, 0, 1, 1], [], []>} : vector<8x128xf32>, vector<128x128xf32>, vector<8x128xf32> -> vector<8x128xf32>
    %41 = arith.addf %38, %40 : vector<8x128xf32>
    %42 = math.tanh %41 : vector<8x128xf32>
    %c6_i32 = arith.constant 6 : i32
    %43 = arith.index_cast %c6_i32 : i32 to index
    %c0_29 = arith.constant 0 : index
    %c0_30 = arith.constant 0 : index
    %44 = vector.load %arg1[%43, %c0_29, %c0_30] : memref<8x8x128xf32, #tpu.memory_space<vmem>>, vector<1x8x128xf32>
    %45 = vector.shape_cast %44 : vector<1x8x128xf32> to vector<8x128xf32>
    %c0_31 = arith.constant 0 : index
    %c0_32 = arith.constant 0 : index
    %46 = vector.load %arg2[%c0_31, %c0_32] : memref<128x128xf32, #tpu.memory_space<vmem>>, vector<128x128xf32>
    %cst_33 = arith.constant dense<0.000000e+00> : vector<8x128xf32>
    %47 = tpu.matmul %42, %46, %cst_33 {dimension_numbers = #tpu.dot_dimension_numbers<[1], [0], [0], [1], [0, 0, 1, 1], [], []>} : vector<8x128xf32>, vector<128x128xf32>, vector<8x128xf32> -> vector<8x128xf32>
    %48 = arith.addf %45, %47 : vector<8x128xf32>
    %49 = math.tanh %48 : vector<8x128xf32>
    %c7_i32 = arith.constant 7 : i32
    %50 = arith.index_cast %c7_i32 : i32 to index
    %c0_34 = arith.constant 0 : index
    %c0_35 = arith.constant 0 : index
    %51 = vector.load %arg1[%50, %c0_34, %c0_35] : memref<8x8x128xf32, #tpu.memory_space<vmem>>, vector<1x8x128xf32>
    %52 = vector.shape_cast %51 : vector<1x8x128xf32> to vector<8x128xf32>
    %c0_36 = arith.constant 0 : index
    %c0_37 = arith.constant 0 : index
    %53 = vector.load %arg2[%c0_36, %c0_37] : memref<128x128xf32, #tpu.memory_space<vmem>>, vector<128x128xf32>
    %cst_38 = arith.constant dense<0.000000e+00> : vector<8x128xf32>
    %54 = tpu.matmul %49, %53, %cst_38 {dimension_numbers = #tpu.dot_dimension_numbers<[1], [0], [0], [1], [0, 0, 1, 1], [], []>} : vector<8x128xf32>, vector<128x128xf32>, vector<8x128xf32> -> vector<8x128xf32>
    %55 = arith.addf %52, %54 : vector<8x128xf32>
    %56 = math.tanh %55 : vector<8x128xf32>
    %c8_i32 = arith.constant 8 : i32
    %c0_39 = arith.constant 0 : index
    %c0_40 = arith.constant 0 : index
    %57 = vector.load %arg3[%c0_39, %c0_40] : memref<8x128xf32, #tpu.memory_space<vmem>>, vector<8x128xf32>
    tpu.vector_store %arg3[%c0_39, %c0_40], %56 {strides = array<i32>} : memref<8x128xf32, #tpu.memory_space<vmem>>, vector<8x128xf32>,
    return
  }
  func.func @transform_0(%arg0: i32) -> (i32, i32, i32) {
    %c0_i32 = arith.constant 0 : i32
    %c0_i32_0 = arith.constant 0 : i32
    %c0_i32_1 = arith.constant 0 : i32
    return %c0_i32, %arg0, %c0_i32_0 : i32, i32, i32
  }
  func.func @transform_1(%arg0: i32) -> (i32, i32) {
    %c0_i32 = arith.constant 0 : i32
    %c0_i32_0 = arith.constant 0 : i32
    %c0_i32_1 = arith.constant 0 : i32
    return %c0_i32, %c0_i32_0 : i32, i32
  }
  func.func @transform_2(%arg0: i32) -> (i32, i32) {
    %c0_i32 = arith.constant 0 : i32
    %c0_i32_0 = arith.constant 0 : i32
    return %arg0, %c0_i32 : i32, i32
  }
}

</mosaic_0001>

<llo_original>
// kernel: tpu_custom_call.1
$region0: #{tpu_custom_call.1}
  #allocation0 [shape = 'u32[]', space=smem, size = 0x4, offset = 0x4, fixed_abs, tag = 'smem constant byte address 0x4 - core index']
  #allocation1 [shape = 'u32[144,128]{1,0:T(1,128)}', space=vmem, size = 0x12000, scoped, tag = 'internal scratch']
  %s0 = inlined_call_operand.hbm [shape: f32[8,8,128], index: 0, kind: input, shape index: {}]
  %s1 = inlined_call_operand.hbm [shape: f32[128,128], index: 1, kind: input, shape index: {}]
  %s2 = inlined_call_operand.hbm [shape: f32[8,128], index: 2, kind: output, shape index: {}]
  %s3 = sld [smem:[#allocation0]]
  $region26: #{tpu_custom_call.1} parent=0
    _
  %s5 = ssub.s32 1, %s3
  %s6 = scalar_select 0, %s5, %s3
  $region1: #{tpu_custom_call.1} parent=0
    #allocation2 [shape = 'u8[32768]{0}', space=vmem, size = 0x8000, scoped, tag = 'input window, operand 0, single buffered']
    #allocation3 [shape = 's32[1]{0}', space=sflag, size = 0x4, scoped, tag = 'scoped memory for tpu_custom_call.1']
    #allocation4 [shape = 's32[1]{0}', space=sflag, size = 0x4, scoped, tag = 'scoped memory for tpu_custom_call.1']
    #allocation5 [shape = 'u8[65536]{0}', space=vmem, size = 0x10000, scoped, tag = 'input window, operand 1, single buffered']
    #allocation6 [shape = 's32[1]{0}', space=sflag, size = 0x4, scoped, tag = 'scoped memory for tpu_custom_call.1']
    #allocation7 [shape = 'u8[4096]{0}', space=vmem, size = 0x1000, scoped, tag = 'output window, operand 0, single buffered']
    %7 = vsyncpa [#allocation3], 0
    %8 = vsyncpa [#allocation6], 0
    %9 = vsyncpa [#allocation4], 0
    // Predicated region
    $region2: #{tpu_custom_call.1} parent=1 // pred_check
      _
    $region3: #{tpu_custom_call.1} parent=1 // pred_check_branch
      %11 = sbr.rel (0) target = $region5
    $region4: #{tpu_custom_call.1} parent=1 // pred_region
      %s13 = ssub.s32 1024, 1024
      %14 = vsyncadd [#allocation3], %s13
      %s15 = sshll.u32 [#allocation2], 4
      %s16 = int_to_ptr.vmem [resolvable:$true] %s15
      %21 = dma.hbm_to_vmem [thread:$0]  %s0, 1024, %s16, [#allocation3], 128, 128, 8
    $region5: #{tpu_custom_call.1} parent=1 // pred_fallthru
      _
    // Predicated region
    $region6: #{tpu_custom_call.1} parent=1 // pred_check
      _
    $region7: #{tpu_custom_call.1} parent=1 // pred_check_branch
      %23 = sbr.rel (0) target = $region9
    $region8: #{tpu_custom_call.1} parent=1 // pred_region
      %s25 = ssub.s32 2048, 2048
      %26 = vsyncadd [#allocation6], %s25
      %s27 = sshll.u32 [#allocation5], 4
      %s28 = int_to_ptr.vmem [resolvable:$true] %s27
      %33 = dma.hbm_to_vmem [thread:$0]  %s1, 2048, %s28, [#allocation6], 128, 128, 8
    $region9: #{tpu_custom_call.1} parent=1 // pred_fallthru
      _
    // Predicated region
    $region10: #{tpu_custom_call.1} parent=1 // pred_check
      _
    $region11: #{tpu_custom_call.1} parent=1 // pred_check_branch
      %35 = sbr.rel (0) target = $region13
    $region12: #{tpu_custom_call.1} parent=1 // pred_region
      %36 = dma.done [#allocation3], 1024
    $region13: #{tpu_custom_call.1} parent=1 // pred_fallthru
      _
    // Predicated region
    $region14: #{tpu_custom_call.1} parent=1 // pred_check
      _
    $region15: #{tpu_custom_call.1} parent=1 // pred_check_branch
      %38 = sbr.rel (0) target = $region17
    $region16: #{tpu_custom_call.1} parent=1 // pred_region
      %39 = dma.done [#allocation6], 2048
    $region17: #{tpu_custom_call.1} parent=1 // pred_fallthru
      _
    %v40 = vld [vmem:[#allocation2] sm:$0xff]
    %v41 = vld [vmem:[#allocation5] sm:$0xff]
    %v42 = vld [vmem:[#allocation5 + $0x8] sm:$0xff]
    %v43 = vld [vmem:[#allocation5 + $0x10] sm:$0xff]
    %v44 = vld [vmem:[#allocation5 + $0x18] sm:$0xff]
    %v45 = vld [vmem:[#allocation5 + $0x20] sm:$0xff]
    %v46 = vld [vmem:[#allocation5 + $0x28] sm:$0xff]
    %v47 = vld [vmem:[#allocation5 + $0x30] sm:$0xff]
    %v48 = vld [vmem:[#allocation5 + $0x38] sm:$0xff]
    %v49 = vld [vmem:[#allocation5 + $0x40] sm:$0xff]
    %v50 = vld [vmem:[#allocation5 + $0x48] sm:$0xff]
    %v51 = vld [vmem:[#allocation5 + $0x50] sm:$0xff]
    %v52 = vld [vmem:[#allocation5 + $0x58] sm:$0xff]
    %v53 = vld [vmem:[#allocation5 + $0x60] sm:$0xff]
    %v54 = vld [vmem:[#allocation5 + $0x68] sm:$0xff]
    %v55 = vld [vmem:[#allocation5 + $0x70] sm:$0xff]
    %v56 = vld [vmem:[#allocation5 + $0x78] sm:$0xff]
    %57 = vmatprep.subr.mxu0 0.0
    %58 = vmatpush1.msra.mxu0 %v41
    %59 = vmatprep.subr.mxu0 0.0
    %60 = vmatpush1.msra.mxu0 %v42
    %61 = vmatprep.subr.mxu0 0.0
    %62 = vmatpush1.msra.mxu0 %v43
    %63 = vmatprep.subr.mxu0 0.0
    %64 = vmatpush1.msra.mxu0 %v44
    %65 = vmatprep.subr.mxu0 0.0
    %66 = vmatpush1.msra.mxu0 %v45
    %67 = vmatprep.subr.mxu0 0.0
    %68 = vmatpush1.msra.mxu0 %v46
    %69 = vmatprep.subr.mxu0 0.0
    %70 = vmatpush1.msra.mxu0 %v47
    %71 = vmatprep.subr.mxu0 0.0
    %72 = vmatpush1.msra.mxu0 %v48
    %73 = vmatprep.subr.mxu0 0.0
    %74 = vmatpush1.msra.mxu0 %v49
    %75 = vmatprep.subr.mxu0 0.0
    %76 = vmatpush1.msra.mxu0 %v50
    %77 = vmatprep.subr.mxu0 0.0
    %78 = vmatpush1.msra.mxu0 %v51
    %79 = vmatprep.subr.mxu0 0.0
    %80 = vmatpush1.msra.mxu0 %v52
    %81 = vmatprep.subr.mxu0 0.0
    %82 = vmatpush1.msra.mxu0 %v53
    %83 = vmatprep.subr.mxu0 0.0
    %84 = vmatpush1.msra.mxu0 %v54
    %85 = vmatprep.subr.mxu0 0.0
    %86 = vmatpush1.msra.mxu0 %v55
    %87 = vmatprep.subr.mxu0 0.0
    %88 = vmatpush1.msra.mxu0 %v56
    %89 = vmatprep.subr.mxu0 0.0
    %90 = vmatpush1.msra.mxu0 0.0
    %91 = vmatprep.subr.mxu0 0.0
    %92 = vmatpush1.msra.mxu0 0.0
    %93 = vmatprep.subr.mxu0 0.0
    %94 = vmatpush1.msra.mxu0 0.0
    %95 = vmatprep.subr.mxu0 0.0
    %96 = vmatpush1.msra.mxu0 0.0
    %97 = vmatprep.subr.mxu0 0.0
    %98 = vmatpush1.msra.mxu0 0.0
    %99 = vmatprep.subr.mxu0 0.0
    %100 = vmatpush1.msra.mxu0 0.0
    %101 = vmatprep.subr.mxu0 0.0
    %102 = vmatpush1.msra.mxu0 0.0
    %103 = vmatprep.subr.mxu0 0.0
    %104 = vmatpush1.msra.mxu0 0.0
    %105 = vmatprep.subr.mxu0 0.0
    %106 = vmatpush1.msra.mxu0 0.0
    %107 = vmatprep.subr.mxu0 0.0
    %108 = vmatpush1.msra.mxu0 0.0
    %109 = vmatprep.subr.mxu0 0.0
    %110 = vmatpush1.msra.mxu0 0.0
    %111 = vmatprep.subr.mxu0 0.0
    %112 = vmatpush1.msra.mxu0 0.0
    %113 = vmatprep.subr.mxu0 0.0
    %114 = vmatpush1.msra.mxu0 0.0
    %115 = vmatprep.subr.mxu0 0.0
    %116 = vmatpush1.msra.mxu0 0.0
    %117 = vmatprep.subr.mxu0 0.0
    %118 = vmatpush1.msra.mxu0 0.0
    %119 = vmatprep.subr.mxu0 0.0
    %120 = vmatpush1.msra.mxu0 0.0
    %121 = vmatprep.mubr.f32.mxu0 0.0
    %122 = vmatmul.mubr.f32.gmra.mrb[0].mxu0 0.0
    %v123 = vpop.f32.mrb[0].mxu0
    %v124 = vadd.f32 0.0, %v123
    %v125 = vpop.f32.mrb[0].mxu0
    %126 = vdwg.mxu0
    %v127 = vadd.f32 %v40, %v124
    %v128 = vtanh.pop %v127
    %s129 = scalar_lea.vmem [#allocation2], 8
    %v130 = vld [vmem:[%s129] sm:$0xff]
    %131 = vmatprep.subr.mxu0 0.0
    %132 = vmatpush1.msra.mxu0 %v41
    %133 = vmatprep.subr.mxu0 0.0
    %134 = vmatpush1.msra.mxu0 %v42
    %135 = vmatprep.subr.mxu0 0.0
    %136 = vmatpush1.msra.mxu0 %v43
    %137 = vmatprep.subr.mxu0 0.0
    %138 = vmatpush1.msra.mxu0 %v44
    %139 = vmatprep.subr.mxu0 0.0
    %140 = vmatpush1.msra.mxu0 %v45
    %141 = vmatprep.subr.mxu0 0.0
    %142 = vmatpush1.msra.mxu0 %v46
    %143 = vmatprep.subr.mxu0 0.0
    %144 = vmatpush1.msra.mxu0 %v47
    %145 = vmatprep.subr.mxu0 0.0
    %146 = vmatpush1.msra.mxu0 %v48
    %147 = vmatprep.subr.mxu0 0.0
    %148 = vmatpush1.msra.mxu0 %v49
    %149 = vmatprep.subr.mxu0 0.0
    %150 = vmatpush1.msra.mxu0 %v50
    %151 = vmatprep.subr.mxu0 0.0
    %152 = vmatpush1.msra.mxu0 %v51
    %153 = vmatprep.subr.mxu0 0.0
    %154 = vmatpush1.msra.mxu0 %v52
    %155 = vmatprep.subr.mxu0 0.0
    %156 = vmatpush1.msra.mxu0 %v53
    %157 = vmatprep.subr.mxu0 0.0
    %158 = vmatpush1.msra.mxu0 %v54
    %159 = vmatprep.subr.mxu0 0.0
    %160 = vmatpush1.msra.mxu0 %v55
    %161 = vmatprep.subr.mxu0 0.0
    %162 = vmatpush1.msra.mxu0 %v56
    %163 = vmatprep.subr.mxu0 0.0
    %164 = vmatpush1.msra.mxu0 0.0
    %165 = vmatprep.subr.mxu0 0.0
    %166 = vmatpush1.msra.mxu0 0.0
    %167 = vmatprep.subr.mxu0 0.0
    %168 = vmatpush1.msra.mxu0 0.0
    %169 = vmatprep.subr.mxu0 0.0
    %170 = vmatpush1.msra.mxu0 0.0
    %171 = vmatprep.subr.mxu0 0.0
    %172 = vmatpush1.msra.mxu0 0.0
    %173 = vmatprep.subr.mxu0 0.0
    %174 = vmatpush1.msra.mxu0 0.0
    %175 = vmatprep.subr.mxu0 0.0
    %176 = vmatpush1.msra.mxu0 0.0
    %177 = vmatprep.subr.mxu0 0.0
    %178 = vmatpush1.msra.mxu0 0.0
    %179 = vmatprep.subr.mxu0 0.0
    %180 = vmatpush1.msra.mxu0 0.0
    %181 = vmatprep.subr.mxu0 0.0
    %182 = vmatpush1.msra.mxu0 0.0
    %183 = vmatprep.subr.mxu0 0.0
    %184 = vmatpush1.msra.mxu0 0.0
    %185 = vmatprep.subr.mxu0 0.0
    %186 = vmatpush1.msra.mxu0 0.0
    %187 = vmatprep.subr.mxu0 0.0
    %188 = vmatpush1.msra.mxu0 0.0
    %189 = vmatprep.subr.mxu0 0.0
    %190 = vmatpush1.msra.mxu0 0.0
    %191 = vmatprep.subr.mxu0 0.0
    %192 = vmatpush1.msra.mxu0 0.0
    %193 = vmatprep.subr.mxu0 0.0
    %194 = vmatpush1.msra.mxu0 0.0
    %195 = vmatprep.mubr.f32.mxu0 0.0
    %196 = vmatmul.mubr.f32.gmra.mrb[0].mxu0 %v128
    %v197 = vpop.f32.mrb[0].mxu0
    %v198 = vadd.f32 0.0, %v197
    %v199 = vpop.f32.mrb[0].mxu0
    %200 = vdwg.mxu0
    %v201 = vadd.f32 %v130, %v198
    %v202 = vtanh.pop %v201
    %s203 = scalar_lea.vmem [#allocation2], 16
    %v204 = vld [vmem:[%s203] sm:$0xff]
    %205 = vmatprep.subr.mxu0 0.0
    %206 = vmatpush1.msra.mxu0 %v41
    %207 = vmatprep.subr.mxu0 0.0
    %208 = vmatpush1.msra.mxu0 %v42
    %209 = vmatprep.subr.mxu0 0.0
    %210 = vmatpush1.msra.mxu0 %v43
    %211 = vmatprep.subr.mxu0 0.0
    %212 = vmatpush1.msra.mxu0 %v44
    %213 = vmatprep.subr.mxu0 0.0
    %214 = vmatpush1.msra.mxu0 %v45
    %215 = vmatprep.subr.mxu0 0.0
    %216 = vmatpush1.msra.mxu0 %v46
    %217 = vmatprep.subr.mxu0 0.0
    %218 = vmatpush1.msra.mxu0 %v47
    %219 = vmatprep.subr.mxu0 0.0
    %220 = vmatpush1.msra.mxu0 %v48
    %221 = vmatprep.subr.mxu0 0.0
    %222 = vmatpush1.msra.mxu0 %v49
    %223 = vmatprep.subr.mxu0 0.0
    %224 = vmatpush1.msra.mxu0 %v50
    %225 = vmatprep.subr.mxu0 0.0
    %226 = vmatpush1.msra.mxu0 %v51
    %227 = vmatprep.subr.mxu0 0.0
    %228 = vmatpush1.msra.mxu0 %v52
    %229 = vmatprep.subr.mxu0 0.0
    %230 = vmatpush1.msra.mxu0 %v53
    %231 = vmatprep.subr.mxu0 0.0
    %232 = vmatpush1.msra.mxu0 %v54
    %233 = vmatprep.subr.mxu0 0.0
    %234 = vmatpush1.msra.mxu0 %v55
    %235 = vmatprep.subr.mxu0 0.0
    %236 = vmatpush1.msra.mxu0 %v56
    %237 = vmatprep.subr.mxu0 0.0
    %238 = vmatpush1.msra.mxu0 0.0
    %239 = vmatprep.subr.mxu0 0.0
    %240 = vmatpush1.msra.mxu0 0.0
    %241 = vmatprep.subr.mxu0 0.0
    %242 = vmatpush1.msra.mxu0 0.0
    %243 = vmatprep.subr.mxu0 0.0
    %244 = vmatpush1.msra.mxu0 0.0
    %245 = vmatprep.subr.mxu0 0.0
    %246 = vmatpush1.msra.mxu0 0.0
    %247 = vmatprep.subr.mxu0 0.0
    %248 = vmatpush1.msra.mxu0 0.0
    %249 = vmatprep.subr.mxu0 0.0
    %250 = vmatpush1.msra.mxu0 0.0
    %251 = vmatprep.subr.mxu0 0.0
    %252 = vmatpush1.msra.mxu0 0.0
    %253 = vmatprep.subr.mxu0 0.0
    %254 = vmatpush1.msra.mxu0 0.0
    %255 = vmatprep.subr.mxu0 0.0
    %256 = vmatpush1.msra.mxu0 0.0
    %257 = vmatprep.subr.mxu0 0.0
    %258 = vmatpush1.msra.mxu0 0.0
    %259 = vmatprep.subr.mxu0 0.0
    %260 = vmatpush1.msra.mxu0 0.0
    %261 = vmatprep.subr.mxu0 0.0
    %262 = vmatpush1.msra.mxu0 0.0
    %263 = vmatprep.subr.mxu0 0.0
    %264 = vmatpush1.msra.mxu0 0.0
    %265 = vmatprep.subr.mxu0 0.0
    %266 = vmatpush1.msra.mxu0 0.0
    %267 = vmatprep.subr.mxu0 0.0
    %268 = vmatpush1.msra.mxu0 0.0
    %269 = vmatprep.mubr.f32.mxu0 0.0
    %270 = vmatmul.mubr.f32.gmra.mrb[0].mxu0 %v202
    %v271 = vpop.f32.mrb[0].mxu0
    %v272 = vadd.f32 0.0, %v271
    %v273 = vpop.f32.mrb[0].mxu0
    %274 = vdwg.mxu0
    %v275 = vadd.f32 %v204, %v272
    %v276 = vtanh.pop %v275
    %s277 = scalar_lea.vmem [#allocation2], 24
    %v278 = vld [vmem:[%s277] sm:$0xff]
    %279 = vmatprep.subr.mxu0 0.0
    %280 = vmatpush1.msra.mxu0 %v41
    %281 = vmatprep.subr.mxu0 0.0
    %282 = vmatpush1.msra.mxu0 %v42
    %283 = vmatprep.subr.mxu0 0.0
    %284 = vmatpush1.msra.mxu0 %v43
    %285 = vmatprep.subr.mxu0 0.0
    %286 = vmatpush1.msra.mxu0 %v44
    %287 = vmatprep.subr.mxu0 0.0
    %288 = vmatpush1.msra.mxu0 %v45
    %289 = vmatprep.subr.mxu0 0.0
    %290 = vmatpush1.msra.mxu0 %v46
    %291 = vmatprep.subr.mxu0 0.0
    %292 = vmatpush1.msra.mxu0 %v47
    %293 = vmatprep.subr.mxu0 0.0
    %294 = vmatpush1.msra.mxu0 %v48
    %295 = vmatprep.subr.mxu0 0.0
    %296 = vmatpush1.msra.mxu0 %v49
    %297 = vmatprep.subr.mxu0 0.0
    %298 = vmatpush1.msra.mxu0 %v50
    %299 = vmatprep.subr.mxu0 0.0
    %300 = vmatpush1.msra.mxu0 %v51
    %301 = vmatprep.subr.mxu0 0.0
    %302 = vmatpush1.msra.mxu0 %v52
    %303 = vmatprep.subr.mxu0 0.0
    %304 = vmatpush1.msra.mxu0 %v53
    %305 = vmatprep.subr.mxu0 0.0
    %306 = vmatpush1.msra.mxu0 %v54
    %307 = vmatprep.subr.mxu0 0.0
    %308 = vmatpush1.msra.mxu0 %v55
    %309 = vmatprep.subr.mxu0 0.0
    %310 = vmatpush1.msra.mxu0 %v56
    %311 = vmatprep.subr.mxu0 0.0
    %312 = vmatpush1.msra.mxu0 0.0
    %313 = vmatprep.subr.mxu0 0.0
    %314 = vmatpush1.msra.mxu0 0.0
    %315 = vmatprep.subr.mxu0 0.0
    %316 = vmatpush1.msra.mxu0 0.0
    %317 = vmatprep.subr.mxu0 0.0
    %318 = vmatpush1.msra.mxu0 0.0
    %319 = vmatprep.subr.mxu0 0.0
    %320 = vmatpush1.msra.mxu0 0.0
    %321 = vmatprep.subr.mxu0 0.0
    %322 = vmatpush1.msra.mxu0 0.0
    %323 = vmatprep.subr.mxu0 0.0
    %324 = vmatpush1.msra.mxu0 0.0
    %325 = vmatprep.subr.mxu0 0.0
    %326 = vmatpush1.msra.mxu0 0.0
    %327 = vmatprep.subr.mxu0 0.0
    %328 = vmatpush1.msra.mxu0 0.0
    %329 = vmatprep.subr.mxu0 0.0
    %330 = vmatpush1.msra.mxu0 0.0
    %331 = vmatprep.subr.mxu0 0.0
    %332 = vmatpush1.msra.mxu0 0.0
    %333 = vmatprep.subr.mxu0 0.0
    %334 = vmatpush1.msra.mxu0 0.0
    %335 = vmatprep.subr.mxu0 0.0
    %336 = vmatpush1.msra.mxu0 0.0
    %337 = vmatprep.subr.mxu0 0.0
    %338 = vmatpush1.msra.mxu0 0.0
    %339 = vmatprep.subr.mxu0 0.0
    %340 = vmatpush1.msra.mxu0 0.0
    %341 = vmatprep.subr.mxu0 0.0
    %342 = vmatpush1.msra.mxu0 0.0
    %343 = vmatprep.mubr.f32.mxu0 0.0
    %344 = vmatmul.mubr.f32.gmra.mrb[0].mxu0 %v276
    %v345 = vpop.f32.mrb[0].mxu0
    %v346 = vadd.f32 0.0, %v345
    %v347 = vpop.f32.mrb[0].mxu0
    %348 = vdwg.mxu0
    %v349 = vadd.f32 %v278, %v346
    %v350 = vtanh.pop %v349
    %s351 = scalar_lea.vmem [#allocation2], 32
    %v352 = vld [vmem:[%s351] sm:$0xff]
    %353 = vmatprep.subr.mxu0 0.0
    %354 = vmatpush1.msra.mxu0 %v41
    %355 = vmatprep.subr.mxu0 0.0
    %356 = vmatpush1.msra.mxu0 %v42
    %357 = vmatprep.subr.mxu0 0.0
    %358 = vmatpush1.msra.mxu0 %v43
    %359 = vmatprep.subr.mxu0 0.0
    %360 = vmatpush1.msra.mxu0 %v44
    %361 = vmatprep.subr.mxu0 0.0
    %362 = vmatpush1.msra.mxu0 %v45
    %363 = vmatprep.subr.mxu0 0.0
    %364 = vmatpush1.msra.mxu0 %v46
    %365 = vmatprep.subr.mxu0 0.0
    %366 = vmatpush1.msra.mxu0 %v47
    %367 = vmatprep.subr.mxu0 0.0
    %368 = vmatpush1.msra.mxu0 %v48
    %369 = vmatprep.subr.mxu0 0.0
    %370 = vmatpush1.msra.mxu0 %v49
    %371 = vmatprep.subr.mxu0 0.0
    %372 = vmatpush1.msra.mxu0 %v50
    %373 = vmatprep.subr.mxu0 0.0
    %374 = vmatpush1.msra.mxu0 %v51
    %375 = vmatprep.subr.mxu0 0.0
    %376 = vmatpush1.msra.mxu0 %v52
    %377 = vmatprep.subr.mxu0 0.0
    %378 = vmatpush1.msra.mxu0 %v53
    %379 = vmatprep.subr.mxu0 0.0
    %380 = vmatpush1.msra.mxu0 %v54
    %381 = vmatprep.subr.mxu0 0.0
    %382 = vmatpush1.msra.mxu0 %v55
    %383 = vmatprep.subr.mxu0 0.0
    %384 = vmatpush1.msra.mxu0 %v56
    %385 = vmatprep.subr.mxu0 0.0
    %386 = vmatpush1.msra.mxu0 0.0
    %387 = vmatprep.subr.mxu0 0.0
    %388 = vmatpush1.msra.mxu0 0.0
    %389 = vmatprep.subr.mxu0 0.0
    %390 = vmatpush1.msra.mxu0 0.0
    %391 = vmatprep.subr.mxu0 0.0
    %392 = vmatpush1.msra.mxu0 0.0
    %393 = vmatprep.subr.mxu0 0.0
    %394 = vmatpush1.msra.mxu0 0.0
    %395 = vmatprep.subr.mxu0 0.0
    %396 = vmatpush1.msra.mxu0 0.0
    %397 = vmatprep.subr.mxu0 0.0
    %398 = vmatpush1.msra.mxu0 0.0
    %399 = vmatprep.subr.mxu0 0.0
    %400 = vmatpush1.msra.mxu0 0.0
    %401 = vmatprep.subr.mxu0 0.0
    %402 = vmatpush1.msra.mxu0 0.0
    %403 = vmatprep.subr.mxu0 0.0
    %404 = vmatpush1.msra.mxu0 0.0
    %405 = vmatprep.subr.mxu0 0.0
    %406 = vmatpush1.msra.mxu0 0.0
    %407 = vmatprep.subr.mxu0 0.0
    %408 = vmatpush1.msra.mxu0 0.0
    %409 = vmatprep.subr.mxu0 0.0
    %410 = vmatpush1.msra.mxu0 0.0
    %411 = vmatprep.subr.mxu0 0.0
    %412 = vmatpush1.msra.mxu0 0.0
    %413 = vmatprep.subr.mxu0 0.0
    %414 = vmatpush1.msra.mxu0 0.0
    %415 = vmatprep.subr.mxu0 0.0
    %416 = vmatpush1.msra.mxu0 0.0
    %417 = vmatprep.mubr.f32.mxu0 0.0
    %418 = vmatmul.mubr.f32.gmra.mrb[0].mxu0 %v350
    %v419 = vpop.f32.mrb[0].mxu0
    %v420 = vadd.f32 0.0, %v419
    %v421 = vpop.f32.mrb[0].mxu0
    %422 = vdwg.mxu0
    %v423 = vadd.f32 %v352, %v420
    %v424 = vtanh.pop %v423
    %s425 = scalar_lea.vmem [#allocation2], 40
    %v426 = vld [vmem:[%s425] sm:$0xff]
    %427 = vmatprep.subr.mxu0 0.0
    %428 = vmatpush1.msra.mxu0 %v41
    %429 = vmatprep.subr.mxu0 0.0
    %430 = vmatpush1.msra.mxu0 %v42
    %431 = vmatprep.subr.mxu0 0.0
    %432 = vmatpush1.msra.mxu0 %v43
    %433 = vmatprep.subr.mxu0 0.0
    %434 = vmatpush1.msra.mxu0 %v44
    %435 = vmatprep.subr.mxu0 0.0
    %436 = vmatpush1.msra.mxu0 %v45
    %437 = vmatprep.subr.mxu0 0.0
    %438 = vmatpush1.msra.mxu0 %v46
    %439 = vmatprep.subr.mxu0 0.0
    %440 = vmatpush1.msra.mxu0 %v47
    %441 = vmatprep.subr.mxu0 0.0
    %442 = vmatpush1.msra.mxu0 %v48
    %443 = vmatprep.subr.mxu0 0.0
    %444 = vmatpush1.msra.mxu0 %v49
    %445 = vmatprep.subr.mxu0 0.0
    %446 = vmatpush1.msra.mxu0 %v50
    %447 = vmatprep.subr.mxu0 0.0
    %448 = vmatpush1.msra.mxu0 %v51
    %449 = vmatprep.subr.mxu0 0.0
    %450 = vmatpush1.msra.mxu0 %v52
    %451 = vmatprep.subr.mxu0 0.0
    %452 = vmatpush1.msra.mxu0 %v53
    %453 = vmatprep.subr.mxu0 0.0
    %454 = vmatpush1.msra.mxu0 %v54
    %455 = vmatprep.subr.mxu0 0.0
    %456 = vmatpush1.msra.mxu0 %v55
    %457 = vmatprep.subr.mxu0 0.0
    %458 = vmatpush1.msra.mxu0 %v56
    %459 = vmatprep.subr.mxu0 0.0
    %460 = vmatpush1.msra.mxu0 0.0
    %461 = vmatprep.subr.mxu0 0.0
    %462 = vmatpush1.msra.mxu0 0.0
    %463 = vmatprep.subr.mxu0 0.0
    %464 = vmatpush1.msra.mxu0 0.0
    %465 = vmatprep.subr.mxu0 0.0
    %466 = vmatpush1.msra.mxu0 0.0
    %467 = vmatprep.subr.mxu0 0.0
    %468 = vmatpush1.msra.mxu0 0.0
    %469 = vmatprep.subr.mxu0 0.0
    %470 = vmatpush1.msra.mxu0 0.0
    %471 = vmatprep.subr.mxu0 0.0
    %472 = vmatpush1.msra.mxu0 0.0
    %473 = vmatprep.subr.mxu0 0.0
    %474 = vmatpush1.msra.mxu0 0.0
    %475 = vmatprep.subr.mxu0 0.0
    %476 = vmatpush1.msra.mxu0 0.0
    %477 = vmatprep.subr.mxu0 0.0
    %478 = vmatpush1.msra.mxu0 0.0
    %479 = vmatprep.subr.mxu0 0.0
    %480 = vmatpush1.msra.mxu0 0.0
    %481 = vmatprep.subr.mxu0 0.0
    %482 = vmatpush1.msra.mxu0 0.0
    %483 = vmatprep.subr.mxu0 0.0
    %484 = vmatpush1.msra.mxu0 0.0
    %485 = vmatprep.subr.mxu0 0.0
    %486 = vmatpush1.msra.mxu0 0.0
    %487 = vmatprep.subr.mxu0 0.0
    %488 = vmatpush1.msra.mxu0 0.0
    %489 = vmatprep.subr.mxu0 0.0
    %490 = vmatpush1.msra.mxu0 0.0
    %491 = vmatprep.mubr.f32.mxu0 0.0
    %492 = vmatmul.mubr.f32.gmra.mrb[0].mxu0 %v424
    %v493 = vpop.f32.mrb[0].mxu0
    %v494 = vadd.f32 0.0, %v493
    %v495 = vpop.f32.mrb[0].mxu0
    %496 = vdwg.mxu0
    %v497 = vadd.f32 %v426, %v494
    %v498 = vtanh.pop %v497
    %s499 = scalar_lea.vmem [#allocation2], 48
    %v500 = vld [vmem:[%s499] sm:$0xff]
    %501 = vmatprep.subr.mxu0 0.0
    %502 = vmatpush1.msra.mxu0 %v41
    %503 = vmatprep.subr.mxu0 0.0
    %504 = vmatpush1.msra.mxu0 %v42
    %505 = vmatprep.subr.mxu0 0.0
    %506 = vmatpush1.msra.mxu0 %v43
    %507 = vmatprep.subr.mxu0 0.0
    %508 = vmatpush1.msra.mxu0 %v44
    %509 = vmatprep.subr.mxu0 0.0
    %510 = vmatpush1.msra.mxu0 %v45
    %511 = vmatprep.subr.mxu0 0.0
    %512 = vmatpush1.msra.mxu0 %v46
    %513 = vmatprep.subr.mxu0 0.0
    %514 = vmatpush1.msra.mxu0 %v47
    %515 = vmatprep.subr.mxu0 0.0
    %516 = vmatpush1.msra.mxu0 %v48
    %517 = vmatprep.subr.mxu0 0.0
    %518 = vmatpush1.msra.mxu0 %v49
    %519 = vmatprep.subr.mxu0 0.0
    %520 = vmatpush1.msra.mxu0 %v50
    %521 = vmatprep.subr.mxu0 0.0
    %522 = vmatpush1.msra.mxu0 %v51
    %523 = vmatprep.subr.mxu0 0.0
    %524 = vmatpush1.msra.mxu0 %v52
    %525 = vmatprep.subr.mxu0 0.0
    %526 = vmatpush1.msra.mxu0 %v53
    %527 = vmatprep.subr.mxu0 0.0
    %528 = vmatpush1.msra.mxu0 %v54
    %529 = vmatprep.subr.mxu0 0.0
    %530 = vmatpush1.msra.mxu0 %v55
    %531 = vmatprep.subr.mxu0 0.0
    %532 = vmatpush1.msra.mxu0 %v56
    %533 = vmatprep.subr.mxu0 0.0
    %534 = vmatpush1.msra.mxu0 0.0
    %535 = vmatprep.subr.mxu0 0.0
    %536 = vmatpush1.msra.mxu0 0.0
    %537 = vmatprep.subr.mxu0 0.0
    %538 = vmatpush1.msra.mxu0 0.0
    %539 = vmatprep.subr.mxu0 0.0
    %540 = vmatpush1.msra.mxu0 0.0
    %541 = vmatprep.subr.mxu0 0.0
    %542 = vmatpush1.msra.mxu0 0.0
    %543 = vmatprep.subr.mxu0 0.0
    %544 = vmatpush1.msra.mxu0 0.0
    %545 = vmatprep.subr.mxu0 0.0
    %546 = vmatpush1.msra.mxu0 0.0
    %547 = vmatprep.subr.mxu0 0.0
    %548 = vmatpush1.msra.mxu0 0.0
    %549 = vmatprep.subr.mxu0 0.0
    %550 = vmatpush1.msra.mxu0 0.0
    %551 = vmatprep.subr.mxu0 0.0
    %552 = vmatpush1.msra.mxu0 0.0
    %553 = vmatprep.subr.mxu0 0.0
    %554 = vmatpush1.msra.mxu0 0.0
    %555 = vmatprep.subr.mxu0 0.0
    %556 = vmatpush1.msra.mxu0 0.0
    %557 = vmatprep.subr.mxu0 0.0
    %558 = vmatpush1.msra.mxu0 0.0
    %559 = vmatprep.subr.mxu0 0.0
    %560 = vmatpush1.msra.mxu0 0.0
    %561 = vmatprep.subr.mxu0 0.0
    %562 = vmatpush1.msra.mxu0 0.0
    %563 = vmatprep.subr.mxu0 0.0
    %564 = vmatpush1.msra.mxu0 0.0
    %565 = vmatprep.mubr.f32.mxu0 0.0
    %566 = vmatmul.mubr.f32.gmra.mrb[0].mxu0 %v498
    %v567 = vpop.f32.mrb[0].mxu0
    %v568 = vadd.f32 0.0, %v567
    %v569 = vpop.f32.mrb[0].mxu0
    %570 = vdwg.mxu0
    %v571 = vadd.f32 %v500, %v568
    %v572 = vtanh.pop %v571
    %s573 = scalar_lea.vmem [#allocation2], 56
    %v574 = vld [vmem:[%s573] sm:$0xff]
    %575 = vmatprep.subr.mxu0 0.0
    %576 = vmatpush1.msra.mxu0 %v41
    %577 = vmatprep.subr.mxu0 0.0
    %578 = vmatpush1.msra.mxu0 %v42
    %579 = vmatprep.subr.mxu0 0.0
    %580 = vmatpush1.msra.mxu0 %v43
    %581 = vmatprep.subr.mxu0 0.0
    %582 = vmatpush1.msra.mxu0 %v44
    %583 = vmatprep.subr.mxu0 0.0
    %584 = vmatpush1.msra.mxu0 %v45
    %585 = vmatprep.subr.mxu0 0.0
    %586 = vmatpush1.msra.mxu0 %v46
    %587 = vmatprep.subr.mxu0 0.0
    %588 = vmatpush1.msra.mxu0 %v47
    %589 = vmatprep.subr.mxu0 0.0
    %590 = vmatpush1.msra.mxu0 %v48
    %591 = vmatprep.subr.mxu0 0.0
    %592 = vmatpush1.msra.mxu0 %v49
    %593 = vmatprep.subr.mxu0 0.0
    %594 = vmatpush1.msra.mxu0 %v50
    %595 = vmatprep.subr.mxu0 0.0
    %596 = vmatpush1.msra.mxu0 %v51
    %597 = vmatprep.subr.mxu0 0.0
    %598 = vmatpush1.msra.mxu0 %v52
    %599 = vmatprep.subr.mxu0 0.0
    %600 = vmatpush1.msra.mxu0 %v53
    %601 = vmatprep.subr.mxu0 0.0
    %602 = vmatpush1.msra.mxu0 %v54
    %603 = vmatprep.subr.mxu0 0.0
    %604 = vmatpush1.msra.mxu0 %v55
    %605 = vmatprep.subr.mxu0 0.0
    %606 = vmatpush1.msra.mxu0 %v56
    %607 = vmatprep.subr.mxu0 0.0
    %608 = vmatpush1.msra.mxu0 0.0
    %609 = vmatprep.subr.mxu0 0.0
    %610 = vmatpush1.msra.mxu0 0.0
    %611 = vmatprep.subr.mxu0 0.0
    %612 = vmatpush1.msra.mxu0 0.0
    %613 = vmatprep.subr.mxu0 0.0
    %614 = vmatpush1.msra.mxu0 0.0
    %615 = vmatprep.subr.mxu0 0.0
    %616 = vmatpush1.msra.mxu0 0.0
    %617 = vmatprep.subr.mxu0 0.0
    %618 = vmatpush1.msra.mxu0 0.0
    %619 = vmatprep.subr.mxu0 0.0
    %620 = vmatpush1.msra.mxu0 0.0
    %621 = vmatprep.subr.mxu0 0.0
    %622 = vmatpush1.msra.mxu0 0.0
    %623 = vmatprep.subr.mxu0 0.0
    %624 = vmatpush1.msra.mxu0 0.0
    %625 = vmatprep.subr.mxu0 0.0
    %626 = vmatpush1.msra.mxu0 0.0
    %627 = vmatprep.subr.mxu0 0.0
    %628 = vmatpush1.msra.mxu0 0.0
    %629 = vmatprep.subr.mxu0 0.0
    %630 = vmatpush1.msra.mxu0 0.0
    %631 = vmatprep.subr.mxu0 0.0
    %632 = vmatpush1.msra.mxu0 0.0
    %633 = vmatprep.subr.mxu0 0.0
    %634 = vmatpush1.msra.mxu0 0.0
    %635 = vmatprep.subr.mxu0 0.0
    %636 = vmatpush1.msra.mxu0 0.0
    %637 = vmatprep.subr.mxu0 0.0
    %638 = vmatpush1.msra.mxu0 0.0
    %639 = vmatprep.mubr.f32.mxu0 0.0
    %640 = vmatmul.mubr.f32.gmra.mrb[0].mxu0 %v572
    %v641 = vpop.f32.mrb[0].mxu0
    %v642 = vadd.f32 0.0, %v641
    %v643 = vpop.f32.mrb[0].mxu0
    %644 = vdwg.mxu0
    %v645 = vadd.f32 %v574, %v642
    %v646 = vtanh.pop %v645
    %647 = vst [vmem:[#allocation7] sm:$0xff] %v646
    // Predicated region
    $region18: #{tpu_custom_call.1} parent=1 // pred_check
      _
    $region19: #{tpu_custom_call.1} parent=1 // pred_check_branch
      %649 = sbr.rel (0) target = $region21
    $region20: #{tpu_custom_call.1} parent=1 // pred_region
      %s651 = ssub.s32 128, 128
      %652 = vsyncadd [#allocation4], %s651
      %s654 = sshll.u32 [#allocation7], 4
      %s655 = int_to_ptr.vmem [resolvable:$true] %s654
      %657 = dma.vmem_to_hbm [thread:$0]  %s655, 128, %s2, [#allocation4]
    $region21: #{tpu_custom_call.1} parent=1 // pred_fallthru
      _
    // Predicated region
    $region22: #{tpu_custom_call.1} parent=1 // pred_check
      _
    $region23: #{tpu_custom_call.1} parent=1 // pred_check_branch
      %659 = sbr.rel (0) target = $region25
    $region24: #{tpu_custom_call.1} parent=1 // pred_region
      %660 = dma.done [#allocation4], 128
    $region25: #{tpu_custom_call.1} parent=1 // pred_fallthru
      _
    %661 = vsyncpa [#allocation3], 1
    %662 = vsyncpa [#allocation6], 1
    %663 = vsyncpa [#allocation4], 1

</llo_original>
